<compile_context>
chip_gen: v5e
topology: v5e:2x2
jax: 0.10.0
libtpu: 0.0.40
codegen_flags: <defaults>
</compile_context>

<pallas_src>
import jax
import jax.numpy as jnp
from jax.experimental import pallas as pl
from jax.experimental.pallas import tpu as pltpu


def _round_up(n, m):
    return ((n + m - 1) // m) * m


def _pad2d(x, rows, cols, dtype=None):
    r, c = x.shape
    out = jnp.pad(x, ((0, rows - r), (0, cols - c)))
    if dtype is not None:
        out = out.astype(dtype)
    return out


# -----------------------------------------------------------------------------
# One-time parameter preparation: pad feature dims to 128-lane multiples and
# cast the matmul weights to bf16.  Runs ONCE (outside the jitted forward), so
# the per-call HBM traffic is only the unavoidable streams.
# -----------------------------------------------------------------------------
def prepare_params(params):
    def prep(w_enc, b_enc, w_head, b_head):
        K, E = w_enc.shape
        J = w_head.shape[1]
        Kp, Ep, Jp = _round_up(K, 128), _round_up(E, 128), _round_up(J, 128)
        return {
            "wenc": _pad2d(w_enc, Kp, Ep, jnp.bfloat16),   # [Kp, Ep] bf16
            "benc": _pad2d(b_enc, 1, Ep, jnp.float32),     # [1,  Ep] f32
            "whead": _pad2d(w_head, Ep, Jp, jnp.bfloat16),  # [Ep, Jp] bf16
            "bhead": _pad2d(b_head, 1, Jp, jnp.float32),    # [1,  Jp] f32
        }

    prepped = {
        "img": prep(params["w_img_enc"], params["b_img_enc"],
                    params["w_img_head"], params["b_img_head"]),
        "txt": prep(params["w_txt_enc"], params["b_txt_enc"],
                    params["w_txt_head"], params["b_txt_head"]),
    }
    joint_dim = int(params["w_img_head"].shape[1])
    return prepped, joint_dim


# -----------------------------------------------------------------------------
# Tile selection helpers.
# -----------------------------------------------------------------------------
_VMEM_BUDGET = 48 * 1024 * 1024   # v7x-safe (64 MiB physical / 32 MiB scoped)


def _pick_tm(B):
    """Batch tile: feed the 256-wide MXU on big batches, keep >=2 parallel
    tiles for v7x's second TensorCore on mid batches, shrink for tiny B."""
    b8 = _round_up(B, 8)
    if b8 >= 512:
        return 256
    if b8 >= 256:
        return 128
    return min(128, b8)


def _pick_tk(Kp, tm, Ep, Jp):
    """Largest 128-multiple divisor of Kp (<=2048) that fits the VMEM budget.
    Resident inputs (b_enc, W_head, b_head) are small; we conservatively
    count the default double-buffering for everything."""
    fixed = (2 * Ep * Jp * 2            # W_head bf16 (double-buffered)
             + 2 * Ep * 4 + 2 * Jp * 4  # biases f32
             + 2 * tm * Jp * 4          # output f32
             + tm * Ep * 4)             # f32 accumulator scratch
    best = None
    cap = min(Kp, 2048)
    tk = 128
    while tk <= cap:
        if Kp % tk == 0:
            need = fixed + 2 * tm * tk * 4 + 2 * tk * Ep * 2
            if need <= _VMEM_BUDGET:
                best = tk
        tk += 128
    if best is None:
        best = 128
    need = fixed + 2 * tm * best * 4 + 2 * best * Ep * 2
    return best, need


# -----------------------------------------------------------------------------
# Kernel 1: fused encoder -> projection head -> L2 normalize (one branch).
# -----------------------------------------------------------------------------
def _embed_kernel(x_ref, wenc_ref, benc_ref, whead_ref, bhead_ref,
                  emb_ref, acc_ref):
    k = pl.program_id(1)

    # Encoder matmul: cast the f32 activation tile to bf16 in-kernel
    # (VPU cast is free under MXU/DMA slack); f32 accumulation.
    part = jnp.dot(x_ref[...].astype(wenc_ref.dtype), wenc_ref[...],
                   preferred_element_type=jnp.float32)

    @pl.when(k == 0)
    def _():
        acc_ref[...] = part          # direct init: no zeros store / read-add

    @pl.when(k != 0)
    def _():
        acc_ref[...] += part

    @pl.when(k == pl.num_programs(1) - 1)
    def _():
        feat = acc_ref[...] + benc_ref[...]                       # f32 epilogue
        emb = jnp.dot(feat.astype(whead_ref.dtype), whead_ref[...],
                      preferred_element_type=jnp.float32) + bhead_ref[...]
        # rsqrt-multiply (EUP slot) instead of sqrt + divide.
        # TODO(synk): PyTorch divides by the raw norm (no eps); the tiny eps
        # here only guards an exactly-zero embedding row against NaN/Inf.
        inv = jax.lax.rsqrt(
            jnp.sum(emb * emb, axis=-1, keepdims=True) + 1e-12)
        emb_ref[...] = emb * inv


def _embed_branch(x, bp):
    """x: [B, K] f32; bp: pre-padded/pre-cast branch params.
    Returns [Bp, Jp] f32 unit-norm embeddings (padded)."""
    B, K = x.shape
    wenc, benc, whead, bhead = bp["wenc"], bp["benc"], bp["whead"], bp["bhead"]
    Kp, Ep = wenc.shape
    Jp = whead.shape[1]

    tm = _pick_tm(B)
    Bp = _round_up(B, tm)
    tk, vmem_need = _pick_tk(Kp, tm, Ep, Jp)

    # Activations stay f32; only pad when shapes actually need it.
    if (B, K) == (Bp, Kp):
        xp = x
    else:
        xp = jnp.pad(x, ((0, Bp - B), (0, Kp - K)))

    grid = (Bp // tm, Kp // tk)

    flops = 2 * Bp * (Kp * Ep + Ep * Jp)
    bytes_accessed = (Bp * Kp * 4 + wenc.size * 2 + whead.size * 2
                      + benc.size * 4 + bhead.size * 4 + Bp * Jp * 4)
    vmem_limit = min(56 << 20, max(32 << 20, int(vmem_need) + (8 << 20)))

    fn = pl.pallas_call(
        _embed_kernel,
        out_shape=jax.ShapeDtypeStruct((Bp, Jp), jnp.float32),
        grid_spec=pltpu.PrefetchScalarGridSpec(
            num_scalar_prefetch=0,
            grid=grid,
            in_specs=[
                pl.BlockSpec((tm, tk), lambda i, k: (i, k)),   # activations f32
                pl.BlockSpec((tk, Ep), lambda i, k: (k, 0)),   # W_enc (K-tiled)
                pl.BlockSpec((1, Ep), lambda i, k: (0, 0)),    # b_enc (resident)
                pl.BlockSpec((Ep, Jp), lambda i, k: (0, 0)),   # W_head (resident)
                pl.BlockSpec((1, Jp), lambda i, k: (0, 0)),    # b_head (resident)
            ],
            out_specs=pl.BlockSpec((tm, Jp), lambda i, k: (i, 0)),
            scratch_shapes=[pltpu.VMEM((tm, Ep), jnp.float32)],
        ),
        compiler_params=pltpu.CompilerParams(
            dimension_semantics=("parallel", "arbitrary"),
            vmem_limit_bytes=vmem_limit),
        cost_estimate=pl.CostEstimate(
            flops=flops, transcendentals=Bp, bytes_accessed=bytes_accessed),
    )
    return fn(xp, wenc, benc, whead, bhead)


# -----------------------------------------------------------------------------
# Kernel 2: CLIP logits = img_emb @ txt_emb.T (contract last dims directly).
# Unit-norm embeddings tolerate bf16 MXU inputs; f32 accumulation.
# TODO(synk): for contrastive-training batch sizes this should be tiled
# (tb x 128k grid) instead of whole-block VMEM; negligible at these sizes.
# -----------------------------------------------------------------------------
def _logits_kernel(iemb_ref, temb_ref, lpi_ref):
    a = iemb_ref[...].astype(jnp.bfloat16)
    b = temb_ref[...].astype(jnp.bfloat16)
    lpi_ref[...] = jax.lax.dot_general(
        a, b,
        dimension_numbers=(((1,), (1,)), ((), ())),
        preferred_element_type=jnp.float32)


def _clip_logits(img_emb_p, txt_emb_p):
    Bp = img_emb_p.shape[0]
    vmem = pl.BlockSpec(memory_space=pltpu.MemorySpace.VMEM)
    fn = pl.pallas_call(
        _logits_kernel,
        out_shape=jax.ShapeDtypeStruct((Bp, Bp), jnp.float32),
        in_specs=[vmem, vmem],
        out_specs=vmem,
    )
    return fn(img_emb_p, txt_emb_p)


# -----------------------------------------------------------------------------
# Forward wrapper (matches CLIPModel.forward semantics).
# -----------------------------------------------------------------------------
def _clip_forward_impl(img, txt, prepped, joint_dim):
    B = img.shape[0]
    img_flat = img.reshape(B, -1)     # [B, C*H*W]
    txt_flat = txt.reshape(B, -1)     # [B, S*Hdim]

    img_emb_p = _embed_branch(img_flat, prepped["img"])
    txt_emb_p = _embed_branch(txt_flat, prepped["txt"])

    logits_p = _clip_logits(img_emb_p, txt_emb_p)

    logits_per_image = logits_p[:B, :B]
    logits_per_text = logits_per_image.T          # free wrapper-side transpose
    img_embed = img_emb_p[:B, :joint_dim]
    txt_embed = txt_emb_p[:B, :joint_dim]
    return logits_per_image, logits_per_text, img_embed, txt_embed


clip_forward = jax.jit(_clip_forward_impl, static_argnums=(3,))


def init_params(key, img_in, txt_in, img_emb_dim, txt_emb_dim, joint_emb_dim):
    ks = jax.random.split(key, 8)

    def lin(kw, kb, din, dout):
        bound = 1.0 / (din ** 0.5)
        w = jax.random.uniform(kw, (din, dout), jnp.float32, -bound, bound)
        b = jax.random.uniform(kb, (1, dout), jnp.float32, -bound, bound)
        return w, b

    w_ie, b_ie = lin(ks[0], ks[1], img_in, img_emb_dim)
    w_te, b_te = lin(ks[2], ks[3], txt_in, txt_emb_dim)
    w_ih, b_ih = lin(ks[4], ks[5], img_emb_dim, joint_emb_dim)
    w_th, b_th = lin(ks[6], ks[7], txt_emb_dim, joint_emb_dim)
    return {
        "w_img_enc": w_ie, "b_img_enc": b_ie,
        "w_txt_enc": w_te, "b_txt_enc": b_te,
        "w_img_head": w_ih, "b_img_head": b_ih,
        "w_txt_head": w_th, "b_txt_head": b_th,
        # present in the module but unused in forward():
        "logit_scale": jnp.log(1.0 / 0.01),
        "logit_scale2": jnp.log(1.0 / 0.07),
    }


def _reference_forward(img, txt, params):
    """Pure-JAX f32 reference for sanity checking."""
    B = img.shape[0]
    xi = img.reshape(B, -1)
    xt = txt.reshape(B, -1)
    fi = xi @ params["w_img_enc"] + params["b_img_enc"]
    ei = fi @ params["w_img_head"] + params["b_img_head"]
    ei = ei / jnp.linalg.norm(ei, axis=-1, keepdims=True)
    ft = xt @ params["w_txt_enc"] + params["b_txt_enc"]
    et = ft @ params["w_txt_head"] + params["b_txt_head"]
    et = et / jnp.linalg.norm(et, axis=-1, keepdims=True)
    lpi = ei @ et.T
    return lpi, lpi.T, ei, et


if __name__ == "__main__":
    key = jax.random.PRNGKey(0)
    k_img, k_txt, k_par = jax.random.split(key, 3)

    B, C, H, W = 2, 4, 16, 16        # image input (NCHW)
    S, Hdim = 8, 32                  # text input  (seq, hidden)
    img_emb_dim, txt_emb_dim, joint_emb_dim = 64, 48, 32

    img = jax.random.normal(k_img, (B, C, H, W), jnp.float32)
    txt = jax.random.normal(k_txt, (B, S, Hdim), jnp.float32)

    params = init_params(k_par, C * H * W, S * Hdim,
                         img_emb_dim, txt_emb_dim, joint_emb_dim)

    # One-time weight preparation (padded + bf16-cast) outside the jit path.
    prepped, joint = prepare_params(params)
    prepped = jax.block_until_ready(prepped)

    outs = clip_forward(img, txt, prepped, joint)
    logits_per_image, logits_per_text, img_embed, txt_embed = \
        jax.block_until_ready(outs)

    # Sanity checks.
    assert logits_per_image.shape == (B, B)
    assert img_embed.shape == (B, joint_emb_dim)
    assert txt_embed.shape == (B, joint_emb_dim)
    assert jnp.allclose(jnp.linalg.norm(img_embed, axis=-1), 1.0, atol=1e-4)
    assert jnp.allclose(jnp.linalg.norm(txt_embed, axis=-1), 1.0, atol=1e-4)
    assert jnp.allclose(logits_per_text, logits_per_image.T, atol=1e-6)

    # Loose comparison vs f32 reference (kernel uses bf16 MXU inputs).
    ref = _reference_forward(img, txt, params)
    assert jnp.allclose(logits_per_image, ref[0], atol=0.1)
    assert jnp.allclose(img_embed, ref[2], atol=0.1)
    assert jnp.allclose(txt_embed, ref[3], atol=0.1)

    print("KERNEL_OK")
</pallas_src>

<mosaic_0001>
module attributes {stable_mosaic.version = 11 : i64} {
  func.func @_embed_kernel(%arg0: i32, %arg1: i32, %arg2: memref<8x1024xf32, #tpu.memory_space<vmem>>, %arg3: memref<1024x128xbf16, #tpu.memory_space<vmem>>, %arg4: memref<1x128xf32, #tpu.memory_space<vmem>>, %arg5: memref<128x128xbf16, #tpu.memory_space<vmem>>, %arg6: memref<1x128xf32, #tpu.memory_space<vmem>>, %arg7: memref<8x128xf32, #tpu.memory_space<vmem>>, %arg8: memref<8x128xf32, #tpu.memory_space<vmem>>) attributes {dimension_semantics = [#tpu.dimension_semantics<parallel>, #tpu.dimension_semantics<arbitrary>], iteration_bounds = array<i64: 1, 1>, scalar_prefetch = 0 : i64, scratch_operands = 1 : i64, tpu.core_type = #tpu.core_type<tc>, window_params = [{transform_indices = @transform_0, window_bounds = array<i64: 8, 1024>}, {transform_indices = @transform_1, window_bounds = array<i64: 1024, 128>}, {pipeline_mode = #tpu.pipeline_mode<synchronous>, transform_indices = @transform_2, window_bounds = array<i64: 1, 128>}, {pipeline_mode = #tpu.pipeline_mode<synchronous>, transform_indices = @transform_3, window_bounds = array<i64: 128, 128>}, {pipeline_mode = #tpu.pipeline_mode<synchronous>, transform_indices = @transform_4, window_bounds = array<i64: 1, 128>}, {transform_indices = @transform_5, window_bounds = array<i64: 8, 128>}]} {
    %c0 = arith.constant 0 : index
    %c0_0 = arith.constant 0 : index
    %0 = vector.load %arg2[%c0, %c0_0] : memref<8x1024xf32, #tpu.memory_space<vmem>>, vector<8x1024xf32>
    %1 = arith.truncf %0 : vector<8x1024xf32> to vector<8x1024xbf16>
    %c0_1 = arith.constant 0 : index
    %c0_2 = arith.constant 0 : index
    %2 = vector.load %arg3[%c0_1, %c0_2] : memref<1024x128xbf16, #tpu.memory_space<vmem>>, vector<1024x128xbf16>
    %cst = arith.constant dense<0.000000e+00> : vector<8x128xf32>
    %3 = tpu.matmul %1, %2, %cst {dimension_numbers = #tpu.dot_dimension_numbers<[1], [0], [0], [1], [0, 0, 1, 1], [], []>} : vector<8x1024xbf16>, vector<1024x128xbf16>, vector<8x128xf32> -> vector<8x128xf32>
    %c0_i32 = arith.constant 0 : i32
    %4 = arith.cmpi eq, %arg1, %c0_i32 : i32
    %5 = arith.extui %4 : i1 to i32
    %c0_i32_3 = arith.constant 0 : i32
    %6 = arith.cmpi ne, %5, %c0_i32_3 : i32
    scf.if %6 {
      %c0_8 = arith.constant 0 : index
      %c0_9 = arith.constant 0 : index
      %13 = vector.load %arg8[%c0_8, %c0_9] : memref<8x128xf32, #tpu.memory_space<vmem>>, vector<8x128xf32>
      tpu.vector_store %arg8[%c0_8, %c0_9], %3 {strides = array<i32>} : memref<8x128xf32, #tpu.memory_space<vmem>>, vector<8x128xf32>,
    } else {
    }
    %c0_i32_4 = arith.constant 0 : i32
    %7 = arith.cmpi ne, %arg1, %c0_i32_4 : i32
    %8 = arith.extui %7 : i1 to i32
    %c0_i32_5 = arith.constant 0 : i32
    %9 = arith.cmpi ne, %8, %c0_i32_5 : i32
    scf.if %9 {
      %c0_8 = arith.constant 0 : index
      %c0_9 = arith.constant 0 : index
      %13 = vector.load %arg8[%c0_8, %c0_9] : memref<8x128xf32, #tpu.memory_space<vmem>>, vector<8x128xf32>
      %14 = arith.addf %13, %3 : vector<8x128xf32>
      %c0_10 = arith.constant 0 : index
      %c0_11 = arith.constant 0 : index
      %15 = vector.load %arg8[%c0_10, %c0_11] : memref<8x128xf32, #tpu.memory_space<vmem>>, vector<8x128xf32>
      tpu.vector_store %arg8[%c0_10, %c0_11], %14 {strides = array<i32>} : memref<8x128xf32, #tpu.memory_space<vmem>>, vector<8x128xf32>,
    } else {
    }
    %c0_i32_6 = arith.constant 0 : i32
    %10 = arith.cmpi eq, %arg1, %c0_i32_6 : i32
    %11 = arith.extui %10 : i1 to i32
    %c0_i32_7 = arith.constant 0 : i32
    %12 = arith.cmpi ne, %11, %c0_i32_7 : i32
    scf.if %12 {
      %c0_8 = arith.constant 0 : index
      %c0_9 = arith.constant 0 : index
      %13 = vector.load %arg8[%c0_8, %c0_9] : memref<8x128xf32, #tpu.memory_space<vmem>>, vector<8x128xf32>
      %c0_10 = arith.constant 0 : index
      %c0_11 = arith.constant 0 : index
      %14 = vector.load %arg4[%c0_10, %c0_11] : memref<1x128xf32, #tpu.memory_space<vmem>>, vector<1x128xf32>
      %15 = vector.broadcast %14 : vector<1x128xf32> to vector<8x128xf32>
      %16 = arith.addf %13, %15 : vector<8x128xf32>
      %17 = arith.truncf %16 : vector<8x128xf32> to vector<8x128xbf16>
      %c0_12 = arith.constant 0 : index
      %c0_13 = arith.constant 0 : index
      %18 = vector.load %arg5[%c0_12, %c0_13] : memref<128x128xbf16, #tpu.memory_space<vmem>>, vector<128x128xbf16>
      %cst_14 = arith.constant dense<0.000000e+00> : vector<8x128xf32>
      %19 = tpu.matmul %17, %18, %cst_14 {dimension_numbers = #tpu.dot_dimension_numbers<[1], [0], [0], [1], [0, 0, 1, 1], [], []>} : vector<8x128xbf16>, vector<128x128xbf16>, vector<8x128xf32> -> vector<8x128xf32>
      %c0_15 = arith.constant 0 : index
      %c0_16 = arith.constant 0 : index
      %20 = vector.load %arg6[%c0_15, %c0_16] : memref<1x128xf32, #tpu.memory_space<vmem>>, vector<1x128xf32>
      %21 = vector.broadcast %20 : vector<1x128xf32> to vector<8x128xf32>
      %22 = arith.addf %19, %21 : vector<8x128xf32>
      %23 = arith.mulf %22, %22 : vector<8x128xf32>
      %cst_17 = arith.constant dense<0.000000e+00> : vector<8xf32>
      %24 = vector.multi_reduction <add>, %23, %cst_17 [1] : vector<8x128xf32> to vector<8xf32>
      %25 = vector.shape_cast %24 : vector<8xf32> to vector<8x1xf32>
      %cst_18 = arith.constant 9.99999996E-13 : f32
      %26 = vector.broadcast %cst_18 : f32 to vector<8x1xf32>
      %27 = arith.addf %25, %26 : vector<8x1xf32>
      %28 = math.rsqrt %27 : vector<8x1xf32>
      %29 = vector.broadcast %28 : vector<8x1xf32> to vector<8x128xf32>
      %30 = arith.mulf %22, %29 : vector<8x128xf32>
      %c0_19 = arith.constant 0 : index
      %c0_20 = arith.constant 0 : index
      %31 = vector.load %arg7[%c0_19, %c0_20] : memref<8x128xf32, #tpu.memory_space<vmem>>, vector<8x128xf32>
      tpu.vector_store %arg7[%c0_19, %c0_20], %30 {strides = array<i32>} : memref<8x128xf32, #tpu.memory_space<vmem>>, vector<8x128xf32>,
    } else {
    }
    return
  }
  func.func @transform_0(%arg0: i32, %arg1: i32) -> (i32, i32) {
    %c0_i32 = arith.constant 0 : i32
    return %arg0, %arg1 : i32, i32
  }
  func.func @transform_1(%arg0: i32, %arg1: i32) -> (i32, i32) {
    %c0_i32 = arith.constant 0 : i32
    %c0_i32_0 = arith.constant 0 : i32
    return %arg1, %c0_i32 : i32, i32
  }
  func.func @transform_2(%arg0: i32, %arg1: i32) -> (i32, i32) {
    %c0_i32 = arith.constant 0 : i32
    %c0_i32_0 = arith.constant 0 : i32
    %c0_i32_1 = arith.constant 0 : i32
    return %c0_i32, %c0_i32_0 : i32, i32
  }
  func.func @transform_3(%arg0: i32, %arg1: i32) -> (i32, i32) {
    %c0_i32 = arith.constant 0 : i32
    %c0_i32_0 = arith.constant 0 : i32
    %c0_i32_1 = arith.constant 0 : i32
    return %c0_i32, %c0_i32_0 : i32, i32
  }
  func.func @transform_4(%arg0: i32, %arg1: i32) -> (i32, i32) {
    %c0_i32 = arith.constant 0 : i32
    %c0_i32_0 = arith.constant 0 : i32
    %c0_i32_1 = arith.constant 0 : i32
    return %c0_i32, %c0_i32_0 : i32, i32
  }
  func.func @transform_5(%arg0: i32, %arg1: i32) -> (i32, i32) {
    %c0_i32 = arith.constant 0 : i32
    %c0_i32_0 = arith.constant 0 : i32
    return %arg0, %c0_i32 : i32, i32
  }
}

module attributes {stable_mosaic.version = 11 : i64} {
  func.func @_logits_kernel(%arg0: memref<8x128xf32, #tpu.memory_space<vmem>>, %arg1: memref<8x128xf32, #tpu.memory_space<vmem>>, %arg2: memref<8x8xf32, #tpu.memory_space<vmem>>) attributes {dimension_semantics = [], scalar_prefetch = 0 : i64, scratch_operands = 0 : i64, tpu.core_type = #tpu.core_type<tc>} {
    %c0 = arith.constant 0 : index
    %c0_0 = arith.constant 0 : index
    %0 = vector.load %arg0[%c0, %c0_0] : memref<8x128xf32, #tpu.memory_space<vmem>>, vector<8x128xf32>
    %1 = arith.truncf %0 : vector<8x128xf32> to vector<8x128xbf16>
    %c0_1 = arith.constant 0 : index
    %c0_2 = arith.constant 0 : index
    %2 = vector.load %arg1[%c0_1, %c0_2] : memref<8x128xf32, #tpu.memory_space<vmem>>, vector<8x128xf32>
    %3 = arith.truncf %2 : vector<8x128xf32> to vector<8x128xbf16>
    %cst = arith.constant dense<0.000000e+00> : vector<8x8xf32>
    %4 = tpu.matmul %1, %3, %cst {dimension_numbers = #tpu.dot_dimension_numbers<[1], [1], [0], [0], [0, 0, 1, 0], [], []>} : vector<8x128xbf16>, vector<8x128xbf16>, vector<8x8xf32> -> vector<8x8xf32>
    %c0_3 = arith.constant 0 : index
    %c0_4 = arith.constant 0 : index
    %5 = vector.load %arg2[%c0_3, %c0_4] : memref<8x8xf32, #tpu.memory_space<vmem>>, vector<8x8xf32>
    tpu.vector_store %arg2[%c0_3, %c0_4], %4 {strides = array<i32>} : memref<8x8xf32, #tpu.memory_space<vmem>>, vector<8x8xf32>,
    return
  }
}

module attributes {stable_mosaic.version = 11 : i64} {
  func.func @_embed_kernel(%arg0: i32, %arg1: i32, %arg2: memref<8x256xf32, #tpu.memory_space<vmem>>, %arg3: memref<256x128xbf16, #tpu.memory_space<vmem>>, %arg4: memref<1x128xf32, #tpu.memory_space<vmem>>, %arg5: memref<128x128xbf16, #tpu.memory_space<vmem>>, %arg6: memref<1x128xf32, #tpu.memory_space<vmem>>, %arg7: memref<8x128xf32, #tpu.memory_space<vmem>>, %arg8: memref<8x128xf32, #tpu.memory_space<vmem>>) attributes {dimension_semantics = [#tpu.dimension_semantics<parallel>, #tpu.dimension_semantics<arbitrary>], iteration_bounds = array<i64: 1, 1>, scalar_prefetch = 0 : i64, scratch_operands = 1 : i64, tpu.core_type = #tpu.core_type<tc>, window_params = [{transform_indices = @transform_0, window_bounds = array<i64: 8, 256>}, {transform_indices = @transform_1, window_bounds = array<i64: 256, 128>}, {pipeline_mode = #tpu.pipeline_mode<synchronous>, transform_indices = @transform_2, window_bounds = array<i64: 1, 128>}, {pipeline_mode = #tpu.pipeline_mode<synchronous>, transform_indices = @transform_3, window_bounds = array<i64: 128, 128>}, {pipeline_mode = #tpu.pipeline_mode<synchronous>, transform_indices = @transform_4, window_bounds = array<i64: 1, 128>}, {transform_indices = @transform_5, window_bounds = array<i64: 8, 128>}]} {
    %c0 = arith.constant 0 : index
    %c0_0 = arith.constant 0 : index
    %0 = vector.load %arg2[%c0, %c0_0] : memref<8x256xf32, #tpu.memory_space<vmem>>, vector<8x256xf32>
    %1 = arith.truncf %0 : vector<8x256xf32> to vector<8x256xbf16>
    %c0_1 = arith.constant 0 : index
    %c0_2 = arith.constant 0 : index
    %2 = vector.load %arg3[%c0_1, %c0_2] : memref<256x128xbf16, #tpu.memory_space<vmem>>, vector<256x128xbf16>
    %cst = arith.constant dense<0.000000e+00> : vector<8x128xf32>
    %3 = tpu.matmul %1, %2, %cst {dimension_numbers = #tpu.dot_dimension_numbers<[1], [0], [0], [1], [0, 0, 1, 1], [], []>} : vector<8x256xbf16>, vector<256x128xbf16>, vector<8x128xf32> -> vector<8x128xf32>
    %c0_i32 = arith.constant 0 : i32
    %4 = arith.cmpi eq, %arg1, %c0_i32 : i32
    %5 = arith.extui %4 : i1 to i32
    %c0_i32_3 = arith.constant 0 : i32
    %6 = arith.cmpi ne, %5, %c0_i32_3 : i32
    scf.if %6 {
      %c0_8 = arith.constant 0 : index
      %c0_9 = arith.constant 0 : index
      %13 = vector.load %arg8[%c0_8, %c0_9] : memref<8x128xf32, #tpu.memory_space<vmem>>, vector<8x128xf32>
      tpu.vector_store %arg8[%c0_8, %c0_9], %3 {strides = array<i32>} : memref<8x128xf32, #tpu.memory_space<vmem>>, vector<8x128xf32>,
    } else {
    }
    %c0_i32_4 = arith.constant 0 : i32
    %7 = arith.cmpi ne, %arg1, %c0_i32_4 : i32
    %8 = arith.extui %7 : i1 to i32
    %c0_i32_5 = arith.constant 0 : i32
    %9 = arith.cmpi ne, %8, %c0_i32_5 : i32
    scf.if %9 {
      %c0_8 = arith.constant 0 : index
      %c0_9 = arith.constant 0 : index
      %13 = vector.load %arg8[%c0_8, %c0_9] : memref<8x128xf32, #tpu.memory_space<vmem>>, vector<8x128xf32>
      %14 = arith.addf %13, %3 : vector<8x128xf32>
      %c0_10 = arith.constant 0 : index
      %c0_11 = arith.constant 0 : index
      %15 = vector.load %arg8[%c0_10, %c0_11] : memref<8x128xf32, #tpu.memory_space<vmem>>, vector<8x128xf32>
      tpu.vector_store %arg8[%c0_10, %c0_11], %14 {strides = array<i32>} : memref<8x128xf32, #tpu.memory_space<vmem>>, vector<8x128xf32>,
    } else {
    }
    %c0_i32_6 = arith.constant 0 : i32
    %10 = arith.cmpi eq, %arg1, %c0_i32_6 : i32
    %11 = arith.extui %10 : i1 to i32
    %c0_i32_7 = arith.constant 0 : i32
    %12 = arith.cmpi ne, %11, %c0_i32_7 : i32
    scf.if %12 {
      %c0_8 = arith.constant 0 : index
      %c0_9 = arith.constant 0 : index
      %13 = vector.load %arg8[%c0_8, %c0_9] : memref<8x128xf32, #tpu.memory_space<vmem>>, vector<8x128xf32>
      %c0_10 = arith.constant 0 : index
      %c0_11 = arith.constant 0 : index
      %14 = vector.load %arg4[%c0_10, %c0_11] : memref<1x128xf32, #tpu.memory_space<vmem>>, vector<1x128xf32>
      %15 = vector.broadcast %14 : vector<1x128xf32> to vector<8x128xf32>
      %16 = arith.addf %13, %15 : vector<8x128xf32>
      %17 = arith.truncf %16 : vector<8x128xf32> to vector<8x128xbf16>
      %c0_12 = arith.constant 0 : index
      %c0_13 = arith.constant 0 : index
      %18 = vector.load %arg5[%c0_12, %c0_13] : memref<128x128xbf16, #tpu.memory_space<vmem>>, vector<128x128xbf16>
      %cst_14 = arith.constant dense<0.000000e+00> : vector<8x128xf32>
      %19 = tpu.matmul %17, %18, %cst_14 {dimension_numbers = #tpu.dot_dimension_numbers<[1], [0], [0], [1], [0, 0, 1, 1], [], []>} : vector<8x128xbf16>, vector<128x128xbf16>, vector<8x128xf32> -> vector<8x128xf32>
      %c0_15 = arith.constant 0 : index
      %c0_16 = arith.constant 0 : index
      %20 = vector.load %arg6[%c0_15, %c0_16] : memref<1x128xf32, #tpu.memory_space<vmem>>, vector<1x128xf32>
      %21 = vector.broadcast %20 : vector<1x128xf32> to vector<8x128xf32>
      %22 = arith.addf %19, %21 : vector<8x128xf32>
      %23 = arith.mulf %22, %22 : vector<8x128xf32>
      %cst_17 = arith.constant dense<0.000000e+00> : vector<8xf32>
      %24 = vector.multi_reduction <add>, %23, %cst_17 [1] : vector<8x128xf32> to vector<8xf32>
      %25 = vector.shape_cast %24 : vector<8xf32> to vector<8x1xf32>
      %cst_18 = arith.constant 9.99999996E-13 : f32
      %26 = vector.broadcast %cst_18 : f32 to vector<8x1xf32>
      %27 = arith.addf %25, %26 : vector<8x1xf32>
      %28 = math.rsqrt %27 : vector<8x1xf32>
      %29 = vector.broadcast %28 : vector<8x1xf32> to vector<8x128xf32>
      %30 = arith.mulf %22, %29 : vector<8x128xf32>
      %c0_19 = arith.constant 0 : index
      %c0_20 = arith.constant 0 : index
      %31 = vector.load %arg7[%c0_19, %c0_20] : memref<8x128xf32, #tpu.memory_space<vmem>>, vector<8x128xf32>
      tpu.vector_store %arg7[%c0_19, %c0_20], %30 {strides = array<i32>} : memref<8x128xf32, #tpu.memory_space<vmem>>, vector<8x128xf32>,
    } else {
    }
    return
  }
  func.func @transform_0(%arg0: i32, %arg1: i32) -> (i32, i32) {
    %c0_i32 = arith.constant 0 : i32
    return %arg0, %arg1 : i32, i32
  }
  func.func @transform_1(%arg0: i32, %arg1: i32) -> (i32, i32) {
    %c0_i32 = arith.constant 0 : i32
    %c0_i32_0 = arith.constant 0 : i32
    return %arg1, %c0_i32 : i32, i32
  }
  func.func @transform_2(%arg0: i32, %arg1: i32) -> (i32, i32) {
    %c0_i32 = arith.constant 0 : i32
    %c0_i32_0 = arith.constant 0 : i32
    %c0_i32_1 = arith.constant 0 : i32
    return %c0_i32, %c0_i32_0 : i32, i32
  }
  func.func @transform_3(%arg0: i32, %arg1: i32) -> (i32, i32) {
    %c0_i32 = arith.constant 0 : i32
    %c0_i32_0 = arith.constant 0 : i32
    %c0_i32_1 = arith.constant 0 : i32
    return %c0_i32, %c0_i32_0 : i32, i32
  }
  func.func @transform_4(%arg0: i32, %arg1: i32) -> (i32, i32) {
    %c0_i32 = arith.constant 0 : i32
    %c0_i32_0 = arith.constant 0 : i32
    %c0_i32_1 = arith.constant 0 : i32
    return %c0_i32, %c0_i32_0 : i32, i32
  }
  func.func @transform_5(%arg0: i32, %arg1: i32) -> (i32, i32) {
    %c0_i32 = arith.constant 0 : i32
    %c0_i32_0 = arith.constant 0 : i32
    return %arg0, %c0_i32 : i32, i32
  }
}

</mosaic_0001>

<llo_original>
// kernel: _clip_forward_impl.5
$region0: #{_clip_forward_impl.5}
  #allocation0 [shape = 'u32[]', space=smem, size = 0x4, offset = 0x4, fixed_abs, tag = 'smem constant byte address 0x4 - core index']
  #allocation1 [shape = 'u32[72,128]{1,0:T(1,128)}', space=vmem, size = 0x9000, scoped, tag = 'internal scratch']
  %s0 = inlined_call_operand.vmem [shape: f32[8,128], index: 0, kind: input, shape index: {}]
  %s1 = inlined_call_operand.vmem [shape: f32[8,128], index: 1, kind: input, shape index: {}]
  %s2 = inlined_call_operand.vmem [shape: f32[8,8], index: 2, kind: output, shape index: {}]
  %s3 = sld [smem:[#allocation0]]
  $region18: #{_clip_forward_impl.5} parent=0
    _
  %s5 = ssub.s32 1, %s3
  %s6 = scalar_select 0, %s5, %s3
  // Predicated region
  $region2: #{_clip_forward_impl.5} parent=0 // pred_check
    _
  $region3: #{_clip_forward_impl.5} parent=0 // pred_check_branch
    %8 = sbr.rel (0) target = $region5
  $region4: #{_clip_forward_impl.5} parent=0 // pred_region
    _
  $region5: #{_clip_forward_impl.5} parent=0 // pred_fallthru
    _
  // Predicated region
  $region6: #{_clip_forward_impl.5} parent=0 // pred_check
    _
  $region7: #{_clip_forward_impl.5} parent=0 // pred_check_branch
    %10 = sbr.rel (0) target = $region9
  $region8: #{_clip_forward_impl.5} parent=0 // pred_region
    _
  $region9: #{_clip_forward_impl.5} parent=0 // pred_fallthru
    _
  %v12 = vld [vmem:[%s0] sm:$0xff]
  %v13 = vpack.c.bf16 %v12, %v12
  %v14 = vld [vmem:[%s1] sm:$0xff]
  %v15 = vpack.c.bf16 %v14, %v14
  %16 = vmatpush.bf16.xpose.msra.mxu0 0
  %17 = vmatpush.bf16.xpose.msra.mxu0 0
  %18 = vmatpush.bf16.xpose.msra.mxu0 0
  %19 = vmatpush.bf16.xpose.msra.mxu0 0
  %20 = vmatpush.bf16.xpose.msra.mxu0 0
  %21 = vmatpush.bf16.xpose.msra.mxu0 0
  %22 = vmatpush.bf16.xpose.msra.mxu0 0
  %23 = vmatpush.bf16.xpose.msra.mxu0 %v15
  %24 = vmatmul.bf16.gmra.mxu0 %v13
  %v25 = vpop.f32.mrf.mxu0
  %v26 = vadd.f32 0.0, %v25
  %v27 = vpop.f32.mrf.mxu0
  %28 = vdwg.mxu0
  %vm29 = vcmask 64512
  %30 = vst.msk [vmem:[%s2] sm:$0xff] %vm29, %v26
  // Predicated region
  $region10: #{_clip_forward_impl.5} parent=0 // pred_check
    _
  $region11: #{_clip_forward_impl.5} parent=0 // pred_check_branch
    %32 = sbr.rel (0) target = $region13
  $region12: #{_clip_forward_impl.5} parent=0 // pred_region
    _
  $region13: #{_clip_forward_impl.5} parent=0 // pred_fallthru
    _
  // Predicated region
  $region14: #{_clip_forward_impl.5} parent=0 // pred_check
    _
  $region15: #{_clip_forward_impl.5} parent=0 // pred_check_branch
    %34 = sbr.rel (0) target = $region17
  $region16: #{_clip_forward_impl.5} parent=0 // pred_region
    _
  $region17: #{_clip_forward_impl.5} parent=0 // pred_fallthru
    _

// kernel: _clip_forward_impl.4
$region0: #{_clip_forward_impl.4}
  #allocation0 [shape = 'u32[]', space=smem, size = 0x4, offset = 0x4, fixed_abs, tag = 'smem constant byte address 0x4 - core index']
  #allocation1 [shape = 'u32[72,128]{1,0:T(1,128)}', space=vmem, size = 0x9000, scoped, tag = 'internal scratch']
  #allocation2 [shape = 'f32[8,128]{1,0:T(8,128)}', space=vmem, size = 0x1000, scoped, tag = 'scratch operand']
  %s0 = inlined_call_operand.vmem [shape: f32[8,256], index: 0, kind: input, shape index: {}]
  %s1 = inlined_call_operand.vmem [shape: bf16[256,128], index: 1, kind: input, shape index: {}]
  %s2 = inlined_call_operand.vmem [shape: f32[1,128], index: 2, kind: input, shape index: {}]
  %s3 = inlined_call_operand.vmem [shape: bf16[128,128], index: 3, kind: input, shape index: {}]
  %s4 = inlined_call_operand.vmem [shape: f32[1,128], index: 4, kind: input, shape index: {}]
  %s5 = inlined_call_operand.vmem [shape: f32[8,128], index: 5, kind: output, shape index: {}]
  %s6 = sld [smem:[#allocation0]]
  $region42: #{_clip_forward_impl.4} parent=0
    _
  %s8 = ssub.s32 1, %s6
  %s9 = scalar_select 0, %s8, %s6
  // Predicated region
  $region2: #{_clip_forward_impl.4} parent=0 // pred_check
    _
  $region3: #{_clip_forward_impl.4} parent=0 // pred_check_branch
    %11 = sbr.rel (0) target = $region5
  $region4: #{_clip_forward_impl.4} parent=0 // pred_region
    _
  $region5: #{_clip_forward_impl.4} parent=0 // pred_fallthru
    _
  // Predicated region
  $region6: #{_clip_forward_impl.4} parent=0 // pred_check
    _
  $region7: #{_clip_forward_impl.4} parent=0 // pred_check_branch
    %13 = sbr.rel (0) target = $region9
  $region8: #{_clip_forward_impl.4} parent=0 // pred_region
    _
  $region9: #{_clip_forward_impl.4} parent=0 // pred_fallthru
    _
  // Predicated region
  $region10: #{_clip_forward_impl.4} parent=0 // pred_check
    _
  $region11: #{_clip_forward_impl.4} parent=0 // pred_check_branch
    %15 = sbr.rel (0) target = $region13
  $region12: #{_clip_forward_impl.4} parent=0 // pred_region
    _
  $region13: #{_clip_forward_impl.4} parent=0 // pred_fallthru
    _
  // Predicated region
  $region14: #{_clip_forward_impl.4} parent=0 // pred_check
    _
  $region15: #{_clip_forward_impl.4} parent=0 // pred_check_branch
    %17 = sbr.rel (0) target = $region17
  $region16: #{_clip_forward_impl.4} parent=0 // pred_region
    _
  $region17: #{_clip_forward_impl.4} parent=0 // pred_fallthru
    _
  // Predicated region
  $region18: #{_clip_forward_impl.4} parent=0 // pred_check
    _
  $region19: #{_clip_forward_impl.4} parent=0 // pred_check_branch
    %19 = sbr.rel (0) target = $region21
  $region20: #{_clip_forward_impl.4} parent=0 // pred_region
    _
  $region21: #{_clip_forward_impl.4} parent=0 // pred_fallthru
    _
  %v20 = vld [vmem:[%s0] sm:$0xff]
  %v21 = vld [vmem:[%s0 + $0x8] sm:$0xff]
  %v22 = vpack.c.bf16 %v20, %v20
  %v23 = vpack.c.bf16 %v21, %v21
  %v24 = vld [vmem:[%s1] sm:$0xf]
  %v25 = vld [vmem:[%s1 + $0x4] sm:$0xf]
  %v26 = vld [vmem:[%s1 + $0x8] sm:$0xf]
  %v27 = vld [vmem:[%s1 + $0xc] sm:$0xf]
  %v28 = vld [vmem:[%s1 + $0x10] sm:$0xf]
  %v29 = vld [vmem:[%s1 + $0x14] sm:$0xf]
  %v30 = vld [vmem:[%s1 + $0x18] sm:$0xf]
  %v31 = vld [vmem:[%s1 + $0x1c] sm:$0xf]
  %v32 = vld [vmem:[%s1 + $0x20] sm:$0xf]
  %v33 = vld [vmem:[%s1 + $0x24] sm:$0xf]
  %v34 = vld [vmem:[%s1 + $0x28] sm:$0xf]
  %v35 = vld [vmem:[%s1 + $0x2c] sm:$0xf]
  %v36 = vld [vmem:[%s1 + $0x30] sm:$0xf]
  %v37 = vld [vmem:[%s1 + $0x34] sm:$0xf]
  %v38 = vld [vmem:[%s1 + $0x38] sm:$0xf]
  %v39 = vld [vmem:[%s1 + $0x3c] sm:$0xf]
  %v40 = vld [vmem:[%s1 + $0x40] sm:$0xf]
  %v41 = vld [vmem:[%s1 + $0x44] sm:$0xf]
  %v42 = vld [vmem:[%s1 + $0x48] sm:$0xf]
  %v43 = vld [vmem:[%s1 + $0x4c] sm:$0xf]
  %v44 = vld [vmem:[%s1 + $0x50] sm:$0xf]
  %v45 = vld [vmem:[%s1 + $0x54] sm:$0xf]
  %v46 = vld [vmem:[%s1 + $0x58] sm:$0xf]
  %v47 = vld [vmem:[%s1 + $0x5c] sm:$0xf]
  %v48 = vld [vmem:[%s1 + $0x60] sm:$0xf]
  %v49 = vld [vmem:[%s1 + $0x64] sm:$0xf]
  %v50 = vld [vmem:[%s1 + $0x68] sm:$0xf]
  %v51 = vld [vmem:[%s1 + $0x6c] sm:$0xf]
  %v52 = vld [vmem:[%s1 + $0x70] sm:$0xf]
  %v53 = vld [vmem:[%s1 + $0x74] sm:$0xf]
  %v54 = vld [vmem:[%s1 + $0x78] sm:$0xf]
  %v55 = vld [vmem:[%s1 + $0x7c] sm:$0xf]
  %v88 = vunpack.c.l.b16 %v24
  %v89 = vunpack.c.l.b16 %v25
  %v90 = vunpack.c.l.b16 %v26
  %v91 = vunpack.c.l.b16 %v27
  %v92 = vunpack.c.l.b16 %v28
  %v93 = vunpack.c.l.b16 %v29
  %v94 = vunpack.c.l.b16 %v30
  %v95 = vunpack.c.l.b16 %v31
  %v96 = vunpack.c.l.b16 %v32
  %v97 = vunpack.c.l.b16 %v33
  %v98 = vunpack.c.l.b16 %v34
  %v99 = vunpack.c.l.b16 %v35
  %v100 = vunpack.c.l.b16 %v36
  %v101 = vunpack.c.l.b16 %v37
  %v102 = vunpack.c.l.b16 %v38
  %v103 = vunpack.c.l.b16 %v39
  %v104 = vunpack.c.l.b16 %v40
  %v105 = vunpack.c.l.b16 %v41
  %v106 = vunpack.c.l.b16 %v42
  %v107 = vunpack.c.l.b16 %v43
  %v108 = vunpack.c.l.b16 %v44
  %v109 = vunpack.c.l.b16 %v45
  %v110 = vunpack.c.l.b16 %v46
  %v111 = vunpack.c.l.b16 %v47
  %v112 = vunpack.c.l.b16 %v48
  %v113 = vunpack.c.l.b16 %v49
  %v114 = vunpack.c.l.b16 %v50
  %v115 = vunpack.c.l.b16 %v51
  %v116 = vunpack.c.l.b16 %v52
  %v117 = vunpack.c.l.b16 %v53
  %v118 = vunpack.c.l.b16 %v54
  %v119 = vunpack.c.l.b16 %v55
  %v120 = vpack.c.b16 %v89, %v88
  %v121 = vpack.c.b16 %v91, %v90
  %v122 = vpack.c.b16 %v93, %v92
  %v123 = vpack.c.b16 %v95, %v94
  %v124 = vpack.c.b16 %v97, %v96
  %v125 = vpack.c.b16 %v99, %v98
  %v126 = vpack.c.b16 %v101, %v100
  %v127 = vpack.c.b16 %v103, %v102
  %v128 = vpack.c.b16 %v105, %v104
  %v129 = vpack.c.b16 %v107, %v106
  %v130 = vpack.c.b16 %v109, %v108
  %v131 = vpack.c.b16 %v111, %v110
  %v132 = vpack.c.b16 %v113, %v112
  %v133 = vpack.c.b16 %v115, %v114
  %v134 = vpack.c.b16 %v117, %v116
  %v135 = vpack.c.b16 %v119, %v118
  %152 = vmatpush.bf16.msra.mxu0 %v127
  %153 = vmatpush.bf16.msra.mxu0 %v126
  %154 = vmatpush.bf16.msra.mxu0 %v125
  %155 = vmatpush.bf16.msra.mxu0 %v124
  %156 = vmatpush.bf16.msra.mxu0 %v123
  %157 = vmatpush.bf16.msra.mxu0 %v122
  %158 = vmatpush.bf16.msra.mxu0 %v121
  %159 = vmatpush.bf16.msra.mxu0 %v120
  %160 = vmatmul.bf16.gmra.mxu0 %v22
  %v161 = vpop.f32.mrf.mxu0
  %v162 = vadd.f32 0.0, %v161
  %v163 = vpop.f32.mrf.mxu0
  %164 = vdwg.mxu0
  %165 = vmatpush.bf16.msra.mxu0 %v135
  %166 = vmatpush.bf16.msra.mxu0 %v134
  %167 = vmatpush.bf16.msra.mxu0 %v133
  %168 = vmatpush.bf16.msra.mxu0 %v132
  %169 = vmatpush.bf16.msra.mxu0 %v131
  %170 = vmatpush.bf16.msra.mxu0 %v130
  %171 = vmatpush.bf16.msra.mxu0 %v129
  %172 = vmatpush.bf16.msra.mxu0 %v128
  %173 = vmatmul.bf16.gmra.mxu0 %v23
  %v174 = vpop.f32.mrf.mxu0
  %v175 = vadd.f32 %v162, %v174
  %v176 = vpop.f32.mrf.mxu0
  %177 = vdwg.mxu0
  %p178 = scmp.eq.s32.totalorder 0, 0
  // Predicated region
  $region22: #{_clip_forward_impl.4} parent=0 // pred_check
    %p179 = pneg %p178
  $region23: #{_clip_forward_impl.4} parent=0 // pred_check_branch
    %181 = sbr.rel (%p179) target = $region25
  $region24: #{_clip_forward_impl.4} parent=0 // pred_region
    %182 = vst [vmem:[#allocation2] sm:$0xff] %v175
  $region25: #{_clip_forward_impl.4} parent=0 // pred_fallthru
    _
  %p183 = scmp.ne.s32.totalorder 0, 0
  // Predicated region
  $region26: #{_clip_forward_impl.4} parent=0 // pred_check
    %p184 = pneg %p183
  $region27: #{_clip_forward_impl.4} parent=0 // pred_check_branch
    %186 = sbr.rel (%p184) target = $region29
  $region28: #{_clip_forward_impl.4} parent=0 // pred_region
    %v187 = vld [vmem:[#allocation2] sm:$0xff]
    %v188 = vadd.f32 %v187, %v175
    %189 = vst [vmem:[#allocation2] sm:$0xff] %v188
  $region29: #{_clip_forward_impl.4} parent=0 // pred_fallthru
    _
  // Predicated region
  $region30: #{_clip_forward_impl.4} parent=0 // pred_check
    %p190 = pneg %p178
  $region31: #{_clip_forward_impl.4} parent=0 // pred_check_branch
    %192 = sbr.rel (%p190) target = $region33
  $region32: #{_clip_forward_impl.4} parent=0 // pred_region
    %v193 = vld [vmem:[#allocation2] sm:$0xff]
    %v194 = vld [vmem:[%s2] sm:$0x1]
    %v196 = vperm.slane %v194, 0
    %v198 = vadd.f32 %v193, %v196
    %v199 = vpack.c.bf16 %v198, %v198
    %v200 = vld [vmem:[%s3] sm:$0xf]
    %v201 = vld [vmem:[%s3 + $0x4] sm:$0xf]
    %v202 = vld [vmem:[%s3 + $0x8] sm:$0xf]
    %v203 = vld [vmem:[%s3 + $0xc] sm:$0xf]
    %v204 = vld [vmem:[%s3 + $0x10] sm:$0xf]
    %v205 = vld [vmem:[%s3 + $0x14] sm:$0xf]
    %v206 = vld [vmem:[%s3 + $0x18] sm:$0xf]
    %v207 = vld [vmem:[%s3 + $0x1c] sm:$0xf]
    %v208 = vld [vmem:[%s3 + $0x20] sm:$0xf]
    %v209 = vld [vmem:[%s3 + $0x24] sm:$0xf]
    %v210 = vld [vmem:[%s3 + $0x28] sm:$0xf]
    %v211 = vld [vmem:[%s3 + $0x2c] sm:$0xf]
    %v212 = vld [vmem:[%s3 + $0x30] sm:$0xf]
    %v213 = vld [vmem:[%s3 + $0x34] sm:$0xf]
    %v214 = vld [vmem:[%s3 + $0x38] sm:$0xf]
    %v215 = vld [vmem:[%s3 + $0x3c] sm:$0xf]
    %v216 = vld [vmem:[%s4] sm:$0x1]
    %v218 = vperm.slane %v216, 0
    %v236 = vunpack.c.l.b16 %v200
    %v237 = vunpack.c.l.b16 %v201
    %v238 = vunpack.c.l.b16 %v202
    %v239 = vunpack.c.l.b16 %v203
    %v240 = vunpack.c.l.b16 %v204
    %v241 = vunpack.c.l.b16 %v205
    %v242 = vunpack.c.l.b16 %v206
    %v243 = vunpack.c.l.b16 %v207
    %v244 = vunpack.c.l.b16 %v208
    %v245 = vunpack.c.l.b16 %v209
    %v246 = vunpack.c.l.b16 %v210
    %v247 = vunpack.c.l.b16 %v211
    %v248 = vunpack.c.l.b16 %v212
    %v249 = vunpack.c.l.b16 %v213
    %v250 = vunpack.c.l.b16 %v214
    %v251 = vunpack.c.l.b16 %v215
    %v252 = vpack.c.b16 %v237, %v236
    %v253 = vpack.c.b16 %v239, %v238
    %v254 = vpack.c.b16 %v241, %v240
    %v255 = vpack.c.b16 %v243, %v242
    %v256 = vpack.c.b16 %v245, %v244
    %v257 = vpack.c.b16 %v247, %v246
    %v258 = vpack.c.b16 %v249, %v248
    %v259 = vpack.c.b16 %v251, %v250
    %268 = vmatpush.bf16.msra.mxu0 %v259
    %269 = vmatpush.bf16.msra.mxu0 %v258
    %270 = vmatpush.bf16.msra.mxu0 %v257
    %271 = vmatpush.bf16.msra.mxu0 %v256
    %272 = vmatpush.bf16.msra.mxu0 %v255
    %273 = vmatpush.bf16.msra.mxu0 %v254
    %274 = vmatpush.bf16.msra.mxu0 %v253
    %275 = vmatpush.bf16.msra.mxu0 %v252
    %276 = vmatmul.bf16.gmra.mxu0 %v199
    %v277 = vpop.f32.mrf.mxu0
    %v278 = vadd.f32 %v218, %v277
    %v279 = vpop.f32.mrf.mxu0
    %280 = vdwg.mxu0
    %v281 = vmul.f32 %v278, %v278
    %282 = vadd.xlane.f32.xlu0 %v281
    %v283 = vpop.xlane.xlu0 %282
    %v284 = vadd.f32 %v283, 1e-12
    %v285 = vrsqrt.pop %v284
    %v286 = vmul.f32 %v285, %v284
    %v287 = vmul.f32 %v286, %v285
    %v288 = vmul.f32 0.5, %v287
    %v289 = vsub.f32 1.5, %v288
    %v290 = vmul.f32 %v285, %v289
    %vm291 = vweird.f32 %v284
    %vm292 = vweird.f32 %v285
    %vm293 = vmor %vm291, %vm292
    %v294 = vsel %vm293, %v285, %v290
    %v295 = vmul.f32 %v278, %v294
    %296 = vst [vmem:[%s5] sm:$0xff] %v295
  $region33: #{_clip_forward_impl.4} parent=0 // pred_fallthru
    _
  // Predicated region
  $region34: #{_clip_forward_impl.4} parent=0 // pred_check
    _
  $region35: #{_clip_forward_impl.4} parent=0 // pred_check_branch
    %298 = sbr.rel (0) target = $region37
  $region36: #{_clip_forward_impl.4} parent=0 // pred_region
    _
  $region37: #{_clip_forward_impl.4} parent=0 // pred_fallthru
    _
  // Predicated region
  $region38: #{_clip_forward_impl.4} parent=0 // pred_check
    _
  $region39: #{_clip_forward_impl.4} parent=0 // pred_check_branch
    %300 = sbr.rel (0) target = $region41
  $region40: #{_clip_forward_impl.4} parent=0 // pred_region
    _
  $region41: #{_clip_forward_impl.4} parent=0 // pred_fallthru
    _

// kernel: _clip_forward_impl.3
$region0: #{_clip_forward_impl.3}
  #allocation0 [shape = 'u32[]', space=smem, size = 0x4, offset = 0x4, fixed_abs, tag = 'smem constant byte address 0x4 - core index']
  #allocation1 [shape = 'u32[72,128]{1,0:T(1,128)}', space=vmem, size = 0x9000, scoped, tag = 'internal scratch']
  #allocation2 [shape = 'f32[8,128]{1,0:T(8,128)}', space=vmem, size = 0x1000, scoped, tag = 'scratch operand']
  %s0 = inlined_call_operand.vmem [shape: f32[8,1024], index: 0, kind: input, shape index: {}]
  %s1 = inlined_call_operand.hbm [shape: bf16[1024,128], index: 1, kind: input, shape index: {}]
  %s2 = inlined_call_operand.vmem [shape: f32[1,128], index: 2, kind: input, shape index: {}]
  %s3 = inlined_call_operand.vmem [shape: bf16[128,128], index: 3, kind: input, shape index: {}]
  %s4 = inlined_call_operand.vmem [shape: f32[1,128], index: 4, kind: input, shape index: {}]
  %s5 = inlined_call_operand.vmem [shape: f32[8,128], index: 5, kind: output, shape index: {}]
  %s6 = sld [smem:[#allocation0]]
  $region46: #{_clip_forward_impl.3} parent=0
    _
  %s8 = ssub.s32 1, %s6
  %s9 = scalar_select 0, %s8, %s6
  $region1: #{_clip_forward_impl.3} parent=0
    #allocation3 [shape = 'u8[262144]{0}', space=vmem, size = 0x40000, scoped, tag = 'input window, operand 1, single buffered']
    #allocation4 [shape = 's32[1]{0}', space=sflag, size = 0x4, scoped, tag = 'scoped memory for _clip_forward_impl.3']
    %10 = vsyncpa [#allocation4], 0
    // Predicated region
    $region2: #{_clip_forward_impl.3} parent=1 // pred_check
      _
    $region3: #{_clip_forward_impl.3} parent=1 // pred_check_branch
      %12 = sbr.rel (0) target = $region5
    $region4: #{_clip_forward_impl.3} parent=1 // pred_region
      _
    $region5: #{_clip_forward_impl.3} parent=1 // pred_fallthru
      _
    // Predicated region
    $region6: #{_clip_forward_impl.3} parent=1 // pred_check
      _
    $region7: #{_clip_forward_impl.3} parent=1 // pred_check_branch
      %14 = sbr.rel (0) target = $region9
    $region8: #{_clip_forward_impl.3} parent=1 // pred_region
      %16 = vsyncadd [#allocation4], 0
      %s17 = sshll.u32 %s1, 4
      %s18 = int_to_ptr.hbm [resolvable:$true] %s17
      %s19 = sshll.u32 [#allocation3], 4
      %s20 = int_to_ptr.vmem [resolvable:$true] %s19
      %25 = dma.hbm_to_vmem [thread:$0]  %s18, 8192, %s20, [#allocation4], 64, 64, 4
    $region9: #{_clip_forward_impl.3} parent=1 // pred_fallthru
      _
    // Predicated region
    $region10: #{_clip_forward_impl.3} parent=1 // pred_check
      _
    $region11: #{_clip_forward_impl.3} parent=1 // pred_check_branch
      %27 = sbr.rel (0) target = $region13
    $region12: #{_clip_forward_impl.3} parent=1 // pred_region
      _
    $region13: #{_clip_forward_impl.3} parent=1 // pred_fallthru
      _
    // Predicated region
    $region14: #{_clip_forward_impl.3} parent=1 // pred_check
      _
    $region15: #{_clip_forward_impl.3} parent=1 // pred_check_branch
      %29 = sbr.rel (0) target = $region17
    $region16: #{_clip_forward_impl.3} parent=1 // pred_region
      _
    $region17: #{_clip_forward_impl.3} parent=1 // pred_fallthru
      _
    // Predicated region
    $region18: #{_clip_forward_impl.3} parent=1 // pred_check
      _
    $region19: #{_clip_forward_impl.3} parent=1 // pred_check_branch
      %31 = sbr.rel (0) target = $region21
    $region20: #{_clip_forward_impl.3} parent=1 // pred_region
      _
    $region21: #{_clip_forward_impl.3} parent=1 // pred_fallthru
      _
    // Predicated region
    $region22: #{_clip_forward_impl.3} parent=1 // pred_check
      _
    $region23: #{_clip_forward_impl.3} parent=1 // pred_check_branch
      %33 = sbr.rel (0) target = $region25
    $region24: #{_clip_forward_impl.3} parent=1 // pred_region
      %35 = dma.done [#allocation4], 8192
    $region25: #{_clip_forward_impl.3} parent=1 // pred_fallthru
      _
    %v36 = vld [vmem:[%s0] sm:$0xff]
    %v37 = vld [vmem:[%s0 + $0x8] sm:$0xff]
    %v38 = vld [vmem:[%s0 + $0x10] sm:$0xff]
    %v39 = vld [vmem:[%s0 + $0x18] sm:$0xff]
    %v40 = vld [vmem:[%s0 + $0x20] sm:$0xff]
    %v41 = vld [vmem:[%s0 + $0x28] sm:$0xff]
    %v42 = vld [vmem:[%s0 + $0x30] sm:$0xff]
    %v43 = vld [vmem:[%s0 + $0x38] sm:$0xff]
    %v44 = vpack.c.bf16 %v36, %v36
    %v45 = vpack.c.bf16 %v37, %v37
    %v46 = vpack.c.bf16 %v38, %v38
    %v47 = vpack.c.bf16 %v39, %v39
    %v48 = vpack.c.bf16 %v40, %v40
    %v49 = vpack.c.bf16 %v41, %v41
    %v50 = vpack.c.bf16 %v42, %v42
    %v51 = vpack.c.bf16 %v43, %v43
    %v52 = vld [vmem:[#allocation3] sm:$0xf]
    %v53 = vld [vmem:[#allocation3 + $0x4] sm:$0xf]
    %v54 = vld [vmem:[#allocation3 + $0x8] sm:$0xf]
    %v55 = vld [vmem:[#allocation3 + $0xc] sm:$0xf]
    %v56 = vld [vmem:[#allocation3 + $0x10] sm:$0xf]
    %v57 = vld [vmem:[#allocation3 + $0x14] sm:$0xf]
    %v58 = vld [vmem:[#allocation3 + $0x18] sm:$0xf]
    %v59 = vld [vmem:[#allocation3 + $0x1c] sm:$0xf]
    %v60 = vld [vmem:[#allocation3 + $0x20] sm:$0xf]
    %v61 = vld [vmem:[#allocation3 + $0x24] sm:$0xf]
    %v62 = vld [vmem:[#allocation3 + $0x28] sm:$0xf]
    %v63 = vld [vmem:[#allocation3 + $0x2c] sm:$0xf]
    %v64 = vld [vmem:[#allocation3 + $0x30] sm:$0xf]
    %v65 = vld [vmem:[#allocation3 + $0x34] sm:$0xf]
    %v66 = vld [vmem:[#allocation3 + $0x38] sm:$0xf]
    %v67 = vld [vmem:[#allocation3 + $0x3c] sm:$0xf]
    %v68 = vld [vmem:[#allocation3 + $0x40] sm:$0xf]
    %v69 = vld [vmem:[#allocation3 + $0x44] sm:$0xf]
    %v70 = vld [vmem:[#allocation3 + $0x48] sm:$0xf]
    %v71 = vld [vmem:[#allocation3 + $0x4c] sm:$0xf]
    %v72 = vld [vmem:[#allocation3 + $0x50] sm:$0xf]
    %v73 = vld [vmem:[#allocation3 + $0x54] sm:$0xf]
    %v74 = vld [vmem:[#allocation3 + $0x58] sm:$0xf]
    %v75 = vld [vmem:[#allocation3 + $0x5c] sm:$0xf]
    %v76 = vld [vmem:[#allocation3 + $0x60] sm:$0xf]
    %v77 = vld [vmem:[#allocation3 + $0x64] sm:$0xf]
    %v78 = vld [vmem:[#allocation3 + $0x68] sm:$0xf]
    %v79 = vld [vmem:[#allocation3 + $0x6c] sm:$0xf]
    %v80 = vld [vmem:[#allocation3 + $0x70] sm:$0xf]
    %v81 = vld [vmem:[#allocation3 + $0x74] sm:$0xf]
    %v82 = vld [vmem:[#allocation3 + $0x78] sm:$0xf]
    %v83 = vld [vmem:[#allocation3 + $0x7c] sm:$0xf]
    %v84 = vld [vmem:[#allocation3 + $0x80] sm:$0xf]
    %v85 = vld [vmem:[#allocation3 + $0x84] sm:$0xf]
    %v86 = vld [vmem:[#allocation3 + $0x88] sm:$0xf]
    %v87 = vld [vmem:[#allocation3 + $0x8c] sm:$0xf]
    %v88 = vld [vmem:[#allocation3 + $0x90] sm:$0xf]
    %v89 = vld [vmem:[#allocation3 + $0x94] sm:$0xf]
    %v90 = vld [vmem:[#allocation3 + $0x98] sm:$0xf]
    %v91 = vld [vmem:[#allocation3 + $0x9c] sm:$0xf]
    %v92 = vld [vmem:[#allocation3 + $0xa0] sm:$0xf]
    %v93 = vld [vmem:[#allocation3 + $0xa4] sm:$0xf]
    %v94 = vld [vmem:[#allocation3 + $0xa8] sm:$0xf]
    %v95 = vld [vmem:[#allocation3 + $0xac] sm:$0xf]
    %v96 = vld [vmem:[#allocation3 + $0xb0] sm:$0xf]
    %v97 = vld [vmem:[#allocation3 + $0xb4] sm:$0xf]
    %v98 = vld [vmem:[#allocation3 + $0xb8] sm:$0xf]
    %v99 = vld [vmem:[#allocation3 + $0xbc] sm:$0xf]
    %v100 = vld [vmem:[#allocation3 + $0xc0] sm:$0xf]
    %v101 = vld [vmem:[#allocation3 + $0xc4] sm:$0xf]
    %v102 = vld [vmem:[#allocation3 + $0xc8] sm:$0xf]
    %v103 = vld [vmem:[#allocation3 + $0xcc] sm:$0xf]
    %v104 = vld [vmem:[#allocation3 + $0xd0] sm:$0xf]
    %v105 = vld [vmem:[#allocation3 + $0xd4] sm:$0xf]
    %v106 = vld [vmem:[#allocation3 + $0xd8] sm:$0xf]
    %v107 = vld [vmem:[#allocation3 + $0xdc] sm:$0xf]
    %v108 = vld [vmem:[#allocation3 + $0xe0] sm:$0xf]
    %v109 = vld [vmem:[#allocation3 + $0xe4] sm:$0xf]
    %v110 = vld [vmem:[#allocation3 + $0xe8] sm:$0xf]
    %v111 = vld [vmem:[#allocation3 + $0xec] sm:$0xf]
    %v112 = vld [vmem:[#allocation3 + $0xf0] sm:$0xf]
    %v113 = vld [vmem:[#allocation3 + $0xf4] sm:$0xf]
    %v114 = vld [vmem:[#allocation3 + $0xf8] sm:$0xf]
    %v115 = vld [vmem:[#allocation3 + $0xfc] sm:$0xf]
    %v116 = vld [vmem:[#allocation3 + $0x100] sm:$0xf]
    %v117 = vld [vmem:[#allocation3 + $0x104] sm:$0xf]
    %v118 = vld [vmem:[#allocation3 + $0x108] sm:$0xf]
    %v119 = vld [vmem:[#allocation3 + $0x10c] sm:$0xf]
    %v120 = vld [vmem:[#allocation3 + $0x110] sm:$0xf]
    %v121 = vld [vmem:[#allocation3 + $0x114] sm:$0xf]
    %v122 = vld [vmem:[#allocation3 + $0x118] sm:$0xf]
    %v123 = vld [vmem:[#allocation3 + $0x11c] sm:$0xf]
    %v124 = vld [vmem:[#allocation3 + $0x120] sm:$0xf]
    %v125 = vld [vmem:[#allocation3 + $0x124] sm:$0xf]
    %v126 = vld [vmem:[#allocation3 + $0x128] sm:$0xf]
    %v127 = vld [vmem:[#allocation3 + $0x12c] sm:$0xf]
    %v128 = vld [vmem:[#allocation3 + $0x130] sm:$0xf]
    %v129 = vld [vmem:[#allocation3 + $0x134] sm:$0xf]
    %v130 = vld [vmem:[#allocation3 + $0x138] sm:$0xf]
    %v131 = vld [vmem:[#allocation3 + $0x13c] sm:$0xf]
    %v132 = vld [vmem:[#allocation3 + $0x140] sm:$0xf]
    %v133 = vld [vmem:[#allocation3 + $0x144] sm:$0xf]
    %v134 = vld [vmem:[#allocation3 + $0x148] sm:$0xf]
    %v135 = vld [vmem:[#allocation3 + $0x14c] sm:$0xf]
    %v136 = vld [vmem:[#allocation3 + $0x150] sm:$0xf]
    %v137 = vld [vmem:[#allocation3 + $0x154] sm:$0xf]
    %v138 = vld [vmem:[#allocation3 + $0x158] sm:$0xf]
    %v139 = vld [vmem:[#allocation3 + $0x15c] sm:$0xf]
    %v140 = vld [vmem:[#allocation3 + $0x160] sm:$0xf]
    %v141 = vld [vmem:[#allocation3 + $0x164] sm:$0xf]
    %v142 = vld [vmem:[#allocation3 + $0x168] sm:$0xf]
    %v143 = vld [vmem:[#allocation3 + $0x16c] sm:$0xf]
    %v144 = vld [vmem:[#allocation3 + $0x170] sm:$0xf]
    %v145 = vld [vmem:[#allocation3 + $0x174] sm:$0xf]
    %v146 = vld [vmem:[#allocation3 + $0x178] sm:$0xf]
    %v147 = vld [vmem:[#allocation3 + $0x17c] sm:$0xf]
    %v148 = vld [vmem:[#allocation3 + $0x180] sm:$0xf]
    %v149 = vld [vmem:[#allocation3 + $0x184] sm:$0xf]
    %v150 = vld [vmem:[#allocation3 + $0x188] sm:$0xf]
    %v151 = vld [vmem:[#allocation3 + $0x18c] sm:$0xf]
    %v152 = vld [vmem:[#allocation3 + $0x190] sm:$0xf]
    %v153 = vld [vmem:[#allocation3 + $0x194] sm:$0xf]
    %v154 = vld [vmem:[#allocation3 + $0x198] sm:$0xf]
    %v155 = vld [vmem:[#allocation3 + $0x19c] sm:$0xf]
    %v156 = vld [vmem:[#allocation3 + $0x1a0] sm:$0xf]
    %v157 = vld [vmem:[#allocation3 + $0x1a4] sm:$0xf]
    %v158 = vld [vmem:[#allocation3 + $0x1a8] sm:$0xf]
    %v159 = vld [vmem:[#allocation3 + $0x1ac] sm:$0xf]
    %v160 = vld [vmem:[#allocation3 + $0x1b0] sm:$0xf]
    %v161 = vld [vmem:[#allocation3 + $0x1b4] sm:$0xf]
    %v162 = vld [vmem:[#allocation3 + $0x1b8] sm:$0xf]
    %v163 = vld [vmem:[#allocation3 + $0x1bc] sm:$0xf]
    %v164 = vld [vmem:[#allocation3 + $0x1c0] sm:$0xf]
    %v165 = vld [vmem:[#allocation3 + $0x1c4] sm:$0xf]
    %v166 = vld [vmem:[#allocation3 + $0x1c8] sm:$0xf]
    %v167 = vld [vmem:[#allocation3 + $0x1cc] sm:$0xf]
    %v168 = vld [vmem:[#allocation3 + $0x1d0] sm:$0xf]
    %v169 = vld [vmem:[#allocation3 + $0x1d4] sm:$0xf]
    %v170 = vld [vmem:[#allocation3 + $0x1d8] sm:$0xf]
    %v171 = vld [vmem:[#allocation3 + $0x1dc] sm:$0xf]
    %v172 = vld [vmem:[#allocation3 + $0x1e0] sm:$0xf]
    %v173 = vld [vmem:[#allocation3 + $0x1e4] sm:$0xf]
    %v174 = vld [vmem:[#allocation3 + $0x1e8] sm:$0xf]
    %v175 = vld [vmem:[#allocation3 + $0x1ec] sm:$0xf]
    %v176 = vld [vmem:[#allocation3 + $0x1f0] sm:$0xf]
    %v177 = vld [vmem:[#allocation3 + $0x1f4] sm:$0xf]
    %v178 = vld [vmem:[#allocation3 + $0x1f8] sm:$0xf]
    %v179 = vld [vmem:[#allocation3 + $0x1fc] sm:$0xf]
    %v308 = vunpack.c.l.b16 %v52
    %v309 = vunpack.c.l.b16 %v53
    %v310 = vunpack.c.l.b16 %v54
    %v311 = vunpack.c.l.b16 %v55
    %v312 = vunpack.c.l.b16 %v56
    %v313 = vunpack.c.l.b16 %v57
    %v314 = vunpack.c.l.b16 %v58
    %v315 = vunpack.c.l.b16 %v59
    %v316 = vunpack.c.l.b16 %v60
    %v317 = vunpack.c.l.b16 %v61
    %v318 = vunpack.c.l.b16 %v62
    %v319 = vunpack.c.l.b16 %v63
    %v320 = vunpack.c.l.b16 %v64
    %v321 = vunpack.c.l.b16 %v65
    %v322 = vunpack.c.l.b16 %v66
    %v323 = vunpack.c.l.b16 %v67
    %v324 = vunpack.c.l.b16 %v68
    %v325 = vunpack.c.l.b16 %v69
    %v326 = vunpack.c.l.b16 %v70
    %v327 = vunpack.c.l.b16 %v71
    %v328 = vunpack.c.l.b16 %v72
    %v329 = vunpack.c.l.b16 %v73
    %v330 = vunpack.c.l.b16 %v74
    %v331 = vunpack.c.l.b16 %v75
    %v332 = vunpack.c.l.b16 %v76
    %v333 = vunpack.c.l.b16 %v77
    %v334 = vunpack.c.l.b16 %v78
    %v335 = vunpack.c.l.b16 %v79
    %v336 = vunpack.c.l.b16 %v80
    %v337 = vunpack.c.l.b16 %v81
    %v338 = vunpack.c.l.b16 %v82
    %v339 = vunpack.c.l.b16 %v83
    %v340 = vunpack.c.l.b16 %v84
    %v341 = vunpack.c.l.b16 %v85
    %v342 = vunpack.c.l.b16 %v86
    %v343 = vunpack.c.l.b16 %v87
    %v344 = vunpack.c.l.b16 %v88
    %v345 = vunpack.c.l.b16 %v89
    %v346 = vunpack.c.l.b16 %v90
    %v347 = vunpack.c.l.b16 %v91
    %v348 = vunpack.c.l.b16 %v92
    %v349 = vunpack.c.l.b16 %v93
    %v350 = vunpack.c.l.b16 %v94
    %v351 = vunpack.c.l.b16 %v95
    %v352 = vunpack.c.l.b16 %v96
    %v353 = vunpack.c.l.b16 %v97
    %v354 = vunpack.c.l.b16 %v98
    %v355 = vunpack.c.l.b16 %v99
    %v356 = vunpack.c.l.b16 %v100
    %v357 = vunpack.c.l.b16 %v101
    %v358 = vunpack.c.l.b16 %v102
    %v359 = vunpack.c.l.b16 %v103
    %v360 = vunpack.c.l.b16 %v104
    %v361 = vunpack.c.l.b16 %v105
    %v362 = vunpack.c.l.b16 %v106
    %v363 = vunpack.c.l.b16 %v107
    %v364 = vunpack.c.l.b16 %v108
    %v365 = vunpack.c.l.b16 %v109
    %v366 = vunpack.c.l.b16 %v110
    %v367 = vunpack.c.l.b16 %v111
    %v368 = vunpack.c.l.b16 %v112
    %v369 = vunpack.c.l.b16 %v113
    %v370 = vunpack.c.l.b16 %v114
    %v371 = vunpack.c.l.b16 %v115
    %v372 = vunpack.c.l.b16 %v116
    %v373 = vunpack.c.l.b16 %v117
    %v374 = vunpack.c.l.b16 %v118
    %v375 = vunpack.c.l.b16 %v119
    %v376 = vunpack.c.l.b16 %v120
    %v377 = vunpack.c.l.b16 %v121
    %v378 = vunpack.c.l.b16 %v122
    %v379 = vunpack.c.l.b16 %v123
    %v380 = vunpack.c.l.b16 %v124
    %v381 = vunpack.c.l.b16 %v125
    %v382 = vunpack.c.l.b16 %v126
    %v383 = vunpack.c.l.b16 %v127
    %v384 = vunpack.c.l.b16 %v128
    %v385 = vunpack.c.l.b16 %v129
    %v386 = vunpack.c.l.b16 %v130
    %v387 = vunpack.c.l.b16 %v131
    %v388 = vunpack.c.l.b16 %v132
    %v389 = vunpack.c.l.b16 %v133
    %v390 = vunpack.c.l.b16 %v134
    %v391 = vunpack.c.l.b16 %v135
    %v392 = vunpack.c.l.b16 %v136
    %v393 = vunpack.c.l.b16 %v137
    %v394 = vunpack.c.l.b16 %v138
    %v395 = vunpack.c.l.b16 %v139
    %v396 = vunpack.c.l.b16 %v140
    %v397 = vunpack.c.l.b16 %v141
    %v398 = vunpack.c.l.b16 %v142
    %v399 = vunpack.c.l.b16 %v143
    %v400 = vunpack.c.l.b16 %v144
    %v401 = vunpack.c.l.b16 %v145
    %v402 = vunpack.c.l.b16 %v146
    %v403 = vunpack.c.l.b16 %v147
    %v404 = vunpack.c.l.b16 %v148
    %v405 = vunpack.c.l.b16 %v149
    %v406 = vunpack.c.l.b16 %v150
    %v407 = vunpack.c.l.b16 %v151
    %v408 = vunpack.c.l.b16 %v152
    %v409 = vunpack.c.l.b16 %v153
    %v410 = vunpack.c.l.b16 %v154
    %v411 = vunpack.c.l.b16 %v155
    %v412 = vunpack.c.l.b16 %v156
    %v413 = vunpack.c.l.b16 %v157
    %v414 = vunpack.c.l.b16 %v158
    %v415 = vunpack.c.l.b16 %v159
    %v416 = vunpack.c.l.b16 %v160
    %v417 = vunpack.c.l.b16 %v161
    %v418 = vunpack.c.l.b16 %v162
    %v419 = vunpack.c.l.b16 %v163
    %v420 = vunpack.c.l.b16 %v164
    %v421 = vunpack.c.l.b16 %v165
    %v422 = vunpack.c.l.b16 %v166
    %v423 = vunpack.c.l.b16 %v167
    %v424 = vunpack.c.l.b16 %v168
    %v425 = vunpack.c.l.b16 %v169
    %v426 = vunpack.c.l.b16 %v170
    %v427 = vunpack.c.l.b16 %v171
    %v428 = vunpack.c.l.b16 %v172
    %v429 = vunpack.c.l.b16 %v173
    %v430 = vunpack.c.l.b16 %v174
    %v431 = vunpack.c.l.b16 %v175
    %v432 = vunpack.c.l.b16 %v176
    %v433 = vunpack.c.l.b16 %v177
    %v434 = vunpack.c.l.b16 %v178
    %v435 = vunpack.c.l.b16 %v179
    %v436 = vpack.c.b16 %v309, %v308
    %v437 = vpack.c.b16 %v311, %v310
    %v438 = vpack.c.b16 %v313, %v312
    %v439 = vpack.c.b16 %v315, %v314
    %v440 = vpack.c.b16 %v317, %v316
    %v441 = vpack.c.b16 %v319, %v318
    %v442 = vpack.c.b16 %v321, %v320
    %v443 = vpack.c.b16 %v323, %v322
    %v444 = vpack.c.b16 %v325, %v324
    %v445 = vpack.c.b16 %v327, %v326
    %v446 = vpack.c.b16 %v329, %v328
    %v447 = vpack.c.b16 %v331, %v330
    %v448 = vpack.c.b16 %v333, %v332
    %v449 = vpack.c.b16 %v335, %v334
    %v450 = vpack.c.b16 %v337, %v336
    %v451 = vpack.c.b16 %v339, %v338
    %v452 = vpack.c.b16 %v341, %v340
    %v453 = vpack.c.b16 %v343, %v342
    %v454 = vpack.c.b16 %v345, %v344
    %v455 = vpack.c.b16 %v347, %v346
    %v456 = vpack.c.b16 %v349, %v348
    %v457 = vpack.c.b16 %v351, %v350
    %v458 = vpack.c.b16 %v353, %v352
    %v459 = vpack.c.b16 %v355, %v354
    %v460 = vpack.c.b16 %v357, %v356
    %v461 = vpack.c.b16 %v359, %v358
    %v462 = vpack.c.b16 %v361, %v360
    %v463 = vpack.c.b16 %v363, %v362
    %v464 = vpack.c.b16 %v365, %v364
    %v465 = vpack.c.b16 %v367, %v366
    %v466 = vpack.c.b16 %v369, %v368
    %v467 = vpack.c.b16 %v371, %v370
    %v468 = vpack.c.b16 %v373, %v372
    %v469 = vpack.c.b16 %v375, %v374
    %v470 = vpack.c.b16 %v377, %v376
    %v471 = vpack.c.b16 %v379, %v378
    %v472 = vpack.c.b16 %v381, %v380
    %v473 = vpack.c.b16 %v383, %v382
    %v474 = vpack.c.b16 %v385, %v384
    %v475 = vpack.c.b16 %v387, %v386
    %v476 = vpack.c.b16 %v389, %v388
    %v477 = vpack.c.b16 %v391, %v390
    %v478 = vpack.c.b16 %v393, %v392
    %v479 = vpack.c.b16 %v395, %v394
    %v480 = vpack.c.b16 %v397, %v396
    %v481 = vpack.c.b16 %v399, %v398
    %v482 = vpack.c.b16 %v401, %v400
    %v483 = vpack.c.b16 %v403, %v402
    %v484 = vpack.c.b16 %v405, %v404
    %v485 = vpack.c.b16 %v407, %v406
    %v486 = vpack.c.b16 %v409, %v408
    %v487 = vpack.c.b16 %v411, %v410
    %v488 = vpack.c.b16 %v413, %v412
    %v489 = vpack.c.b16 %v415, %v414
    %v490 = vpack.c.b16 %v417, %v416
    %v491 = vpack.c.b16 %v419, %v418
    %v492 = vpack.c.b16 %v421, %v420
    %v493 = vpack.c.b16 %v423, %v422
    %v494 = vpack.c.b16 %v425, %v424
    %v495 = vpack.c.b16 %v427, %v426
    %v496 = vpack.c.b16 %v429, %v428
    %v497 = vpack.c.b16 %v431, %v430
    %v498 = vpack.c.b16 %v433, %v432
    %v499 = vpack.c.b16 %v435, %v434
    %564 = vmatpush.bf16.msra.mxu0 %v443
    %565 = vmatpush.bf16.msra.mxu0 %v442
    %566 = vmatpush.bf16.msra.mxu0 %v441
    %567 = vmatpush.bf16.msra.mxu0 %v440
    %568 = vmatpush.bf16.msra.mxu0 %v439
    %569 = vmatpush.bf16.msra.mxu0 %v438
    %570 = vmatpush.bf16.msra.mxu0 %v437
    %571 = vmatpush.bf16.msra.mxu0 %v436
    %572 = vmatmul.bf16.gmra.mxu0 %v44
    %v573 = vpop.f32.mrf.mxu0
    %v574 = vadd.f32 0.0, %v573
    %v575 = vpop.f32.mrf.mxu0
    %576 = vdwg.mxu0
    %577 = vmatpush.bf16.msra.mxu0 %v451
    %578 = vmatpush.bf16.msra.mxu0 %v450
    %579 = vmatpush.bf16.msra.mxu0 %v449
    %580 = vmatpush.bf16.msra.mxu0 %v448
    %581 = vmatpush.bf16.msra.mxu0 %v447
    %582 = vmatpush.bf16.msra.mxu0 %v446
    %583 = vmatpush.bf16.msra.mxu0 %v445
    %584 = vmatpush.bf16.msra.mxu0 %v444
    %585 = vmatmul.bf16.gmra.mxu0 %v45
    %v586 = vpop.f32.mrf.mxu0
    %v587 = vadd.f32 %v574, %v586
    %v588 = vpop.f32.mrf.mxu0
    %589 = vdwg.mxu0
    %590 = vmatpush.bf16.msra.mxu0 %v459
    %591 = vmatpush.bf16.msra.mxu0 %v458
    %592 = vmatpush.bf16.msra.mxu0 %v457
    %593 = vmatpush.bf16.msra.mxu0 %v456
    %594 = vmatpush.bf16.msra.mxu0 %v455
    %595 = vmatpush.bf16.msra.mxu0 %v454
    %596 = vmatpush.bf16.msra.mxu0 %v453
    %597 = vmatpush.bf16.msra.mxu0 %v452
    %598 = vmatmul.bf16.gmra.mxu0 %v46
    %v599 = vpop.f32.mrf.mxu0
    %v600 = vadd.f32 %v587, %v599
    %v601 = vpop.f32.mrf.mxu0
    %602 = vdwg.mxu0
    %603 = vmatpush.bf16.msra.mxu0 %v467
    %604 = vmatpush.bf16.msra.mxu0 %v466
    %605 = vmatpush.bf16.msra.mxu0 %v465
    %606 = vmatpush.bf16.msra.mxu0 %v464
    %607 = vmatpush.bf16.msra.mxu0 %v463
    %608 = vmatpush.bf16.msra.mxu0 %v462
    %609 = vmatpush.bf16.msra.mxu0 %v461
    %610 = vmatpush.bf16.msra.mxu0 %v460
    %611 = vmatmul.bf16.gmra.mxu0 %v47
    %v612 = vpop.f32.mrf.mxu0
    %v613 = vadd.f32 %v600, %v612
    %v614 = vpop.f32.mrf.mxu0
    %615 = vdwg.mxu0
    %616 = vmatpush.bf16.msra.mxu0 %v475
    %617 = vmatpush.bf16.msra.mxu0 %v474
    %618 = vmatpush.bf16.msra.mxu0 %v473
    %619 = vmatpush.bf16.msra.mxu0 %v472
    %620 = vmatpush.bf16.msra.mxu0 %v471
    %621 = vmatpush.bf16.msra.mxu0 %v470
    %622 = vmatpush.bf16.msra.mxu0 %v469
    %623 = vmatpush.bf16.msra.mxu0 %v468
    %624 = vmatmul.bf16.gmra.mxu0 %v48
    %v625 = vpop.f32.mrf.mxu0
    %v626 = vadd.f32 %v613, %v625
    %v627 = vpop.f32.mrf.mxu0
    %628 = vdwg.mxu0
    %629 = vmatpush.bf16.msra.mxu0 %v483
    %630 = vmatpush.bf16.msra.mxu0 %v482
    %631 = vmatpush.bf16.msra.mxu0 %v481
    %632 = vmatpush.bf16.msra.mxu0 %v480
    %633 = vmatpush.bf16.msra.mxu0 %v479
    %634 = vmatpush.bf16.msra.mxu0 %v478
    %635 = vmatpush.bf16.msra.mxu0 %v477
    %636 = vmatpush.bf16.msra.mxu0 %v476
    %637 = vmatmul.bf16.gmra.mxu0 %v49
    %v638 = vpop.f32.mrf.mxu0
    %v639 = vadd.f32 %v626, %v638
    %v640 = vpop.f32.mrf.mxu0
    %641 = vdwg.mxu0
    %642 = vmatpush.bf16.msra.mxu0 %v491
    %643 = vmatpush.bf16.msra.mxu0 %v490
    %644 = vmatpush.bf16.msra.mxu0 %v489
    %645 = vmatpush.bf16.msra.mxu0 %v488
    %646 = vmatpush.bf16.msra.mxu0 %v487
    %647 = vmatpush.bf16.msra.mxu0 %v486
    %648 = vmatpush.bf16.msra.mxu0 %v485
    %649 = vmatpush.bf16.msra.mxu0 %v484
    %650 = vmatmul.bf16.gmra.mxu0 %v50
    %v651 = vpop.f32.mrf.mxu0
    %v652 = vadd.f32 %v639, %v651
    %v653 = vpop.f32.mrf.mxu0
    %654 = vdwg.mxu0
    %655 = vmatpush.bf16.msra.mxu0 %v499
    %656 = vmatpush.bf16.msra.mxu0 %v498
    %657 = vmatpush.bf16.msra.mxu0 %v497
    %658 = vmatpush.bf16.msra.mxu0 %v496
    %659 = vmatpush.bf16.msra.mxu0 %v495
    %660 = vmatpush.bf16.msra.mxu0 %v494
    %661 = vmatpush.bf16.msra.mxu0 %v493
    %662 = vmatpush.bf16.msra.mxu0 %v492
    %663 = vmatmul.bf16.gmra.mxu0 %v51
    %v664 = vpop.f32.mrf.mxu0
    %v665 = vadd.f32 %v652, %v664
    %v666 = vpop.f32.mrf.mxu0
    %667 = vdwg.mxu0
    %p668 = scmp.eq.s32.totalorder 0, 0
    // Predicated region
    $region26: #{_clip_forward_impl.3} parent=1 // pred_check
      %p669 = pneg %p668
    $region27: #{_clip_forward_impl.3} parent=1 // pred_check_branch
      %671 = sbr.rel (%p669) target = $region29
    $region28: #{_clip_forward_impl.3} parent=1 // pred_region
      %672 = vst [vmem:[#allocation2] sm:$0xff] %v665
    $region29: #{_clip_forward_impl.3} parent=1 // pred_fallthru
      _
    %p673 = scmp.ne.s32.totalorder 0, 0
    // Predicated region
    $region30: #{_clip_forward_impl.3} parent=1 // pred_check
      %p674 = pneg %p673
    $region31: #{_clip_forward_impl.3} parent=1 // pred_check_branch
      %676 = sbr.rel (%p674) target = $region33
    $region32: #{_clip_forward_impl.3} parent=1 // pred_region
      %v677 = vld [vmem:[#allocation2] sm:$0xff]
      %v678 = vadd.f32 %v677, %v665
      %679 = vst [vmem:[#allocation2] sm:$0xff] %v678
    $region33: #{_clip_forward_impl.3} parent=1 // pred_fallthru
      _
    // Predicated region
    $region34: #{_clip_forward_impl.3} parent=1 // pred_check
      %p680 = pneg %p668
    $region35: #{_clip_forward_impl.3} parent=1 // pred_check_branch
      %682 = sbr.rel (%p680) target = $region37
    $region36: #{_clip_forward_impl.3} parent=1 // pred_region
      %v683 = vld [vmem:[#allocation2] sm:$0xff]
      %v684 = vld [vmem:[%s2] sm:$0x1]
      %v686 = vperm.slane %v684, 0
      %v688 = vadd.f32 %v683, %v686
      %v689 = vpack.c.bf16 %v688, %v688
      %v690 = vld [vmem:[%s3] sm:$0xf]
      %v691 = vld [vmem:[%s3 + $0x4] sm:$0xf]
      %v692 = vld [vmem:[%s3 + $0x8] sm:$0xf]
      %v693 = vld [vmem:[%s3 + $0xc] sm:$0xf]
      %v694 = vld [vmem:[%s3 + $0x10] sm:$0xf]
      %v695 = vld [vmem:[%s3 + $0x14] sm:$0xf]
      %v696 = vld [vmem:[%s3 + $0x18] sm:$0xf]
      %v697 = vld [vmem:[%s3 + $0x1c] sm:$0xf]
      %v698 = vld [vmem:[%s3 + $0x20] sm:$0xf]
      %v699 = vld [vmem:[%s3 + $0x24] sm:$0xf]
      %v700 = vld [vmem:[%s3 + $0x28] sm:$0xf]
      %v701 = vld [vmem:[%s3 + $0x2c] sm:$0xf]
      %v702 = vld [vmem:[%s3 + $0x30] sm:$0xf]
      %v703 = vld [vmem:[%s3 + $0x34] sm:$0xf]
      %v704 = vld [vmem:[%s3 + $0x38] sm:$0xf]
      %v705 = vld [vmem:[%s3 + $0x3c] sm:$0xf]
      %v706 = vld [vmem:[%s4] sm:$0x1]
      %v708 = vperm.slane %v706, 0
      %v726 = vunpack.c.l.b16 %v690
      %v727 = vunpack.c.l.b16 %v691
      %v728 = vunpack.c.l.b16 %v692
      %v729 = vunpack.c.l.b16 %v693
      %v730 = vunpack.c.l.b16 %v694
      %v731 = vunpack.c.l.b16 %v695
      %v732 = vunpack.c.l.b16 %v696
      %v733 = vunpack.c.l.b16 %v697
      %v734 = vunpack.c.l.b16 %v698
      %v735 = vunpack.c.l.b16 %v699
      %v736 = vunpack.c.l.b16 %v700
      %v737 = vunpack.c.l.b16 %v701
      %v738 = vunpack.c.l.b16 %v702
      %v739 = vunpack.c.l.b16 %v703
      %v740 = vunpack.c.l.b16 %v704
      %v741 = vunpack.c.l.b16 %v705
      %v742 = vpack.c.b16 %v727, %v726
      %v743 = vpack.c.b16 %v729, %v728
      %v744 = vpack.c.b16 %v731, %v730
      %v745 = vpack.c.b16 %v733, %v732
      %v746 = vpack.c.b16 %v735, %v734
      %v747 = vpack.c.b16 %v737, %v736
      %v748 = vpack.c.b16 %v739, %v738
      %v749 = vpack.c.b16 %v741, %v740
      %758 = vmatpush.bf16.msra.mxu0 %v749
      %759 = vmatpush.bf16.msra.mxu0 %v748
      %760 = vmatpush.bf16.msra.mxu0 %v747
      %761 = vmatpush.bf16.msra.mxu0 %v746
      %762 = vmatpush.bf16.msra.mxu0 %v745
      %763 = vmatpush.bf16.msra.mxu0 %v744
      %764 = vmatpush.bf16.msra.mxu0 %v743
      %765 = vmatpush.bf16.msra.mxu0 %v742
      %766 = vmatmul.bf16.gmra.mxu0 %v689
      %v767 = vpop.f32.mrf.mxu0
      %v768 = vadd.f32 %v708, %v767
      %v769 = vpop.f32.mrf.mxu0
      %770 = vdwg.mxu0
      %v771 = vmul.f32 %v768, %v768
      %772 = vadd.xlane.f32.xlu0 %v771
      %v773 = vpop.xlane.xlu0 %772
      %v774 = vadd.f32 %v773, 1e-12
      %v775 = vrsqrt.pop %v774
      %v776 = vmul.f32 %v775, %v774
      %v777 = vmul.f32 %v776, %v775
      %v778 = vmul.f32 0.5, %v777
      %v779 = vsub.f32 1.5, %v778
      %v780 = vmul.f32 %v775, %v779
      %vm781 = vweird.f32 %v774
      %vm782 = vweird.f32 %v775
      %vm783 = vmor %vm781, %vm782
      %v784 = vsel %vm783, %v775, %v780
      %v785 = vmul.f32 %v768, %v784
      %786 = vst [vmem:[%s5] sm:$0xff] %v785
    $region37: #{_clip_forward_impl.3} parent=1 // pred_fallthru
      _
    // Predicated region
    $region38: #{_clip_forward_impl.3} parent=1 // pred_check
      _
    $region39: #{_clip_forward_impl.3} parent=1 // pred_check_branch
      %788 = sbr.rel (0) target = $region41
    $region40: #{_clip_forward_impl.3} parent=1 // pred_region
      _
    $region41: #{_clip_forward_impl.3} parent=1 // pred_fallthru
      _
    // Predicated region
    $region42: #{_clip_forward_impl.3} parent=1 // pred_check
      _
    $region43: #{_clip_forward_impl.3} parent=1 // pred_check_branch
      %790 = sbr.rel (0) target = $region45
    $region44: #{_clip_forward_impl.3} parent=1 // pred_region
      _
    $region45: #{_clip_forward_impl.3} parent=1 // pred_fallthru
      _
    %791 = vsyncpa [#allocation4], 1

</llo_original>
